<compile_context>
chip_gen: v6e
topology: v6e:2x2x1
jax: 0.10.0
libtpu: 0.0.40
codegen_flags: <defaults>
</compile_context>

<pallas_src>
import math

import jax
import jax.numpy as jnp
from jax.experimental import pallas as pl
from jax.experimental.pallas import tpu as pltpu

# ----------------------------- config ---------------------------------------
D_MODEL = 32
VOCAB = 40
B, S = 2, 8

MAX_BLOCK_M = 512          # row-tile cap (≈85% of HBM roofline at scale)
PAD_BIAS = -1e30           # padded vocab columns: exp() == 0, never wins max


# ----------------------------- Pallas kernel --------------------------------
def generator_kernel(x_ref, w_ref, b_ref, o_ref):
    # x: (TM, D)   w: (D, Vp)   b: (1, Vp)   ->   o: (TM, Vp) log-probabilities
    logits = jnp.dot(x_ref[...], w_ref[...],
                     preferred_element_type=jnp.float32) + b_ref[...]
    # numerically-stable log_softmax over the last (lane) dim; pad columns hold
    # -1e30 so they contribute exp()=0 and never win the max.
    m = jnp.max(logits, axis=-1, keepdims=True)
    shifted = logits - m
    lse = jnp.log(jnp.sum(jnp.exp(shifted), axis=-1, keepdims=True))
    o_ref[...] = shifted - lse


# ----------------------------- wrapper ---------------------------------------
def generator_forward(x, w, b):
    """log_softmax(x @ w + b, axis=-1). x: (..., D), w: (D, V), b: (V,)|(1,V)."""
    *lead, D = x.shape
    V = w.shape[1]
    M = 1
    for d in lead:
        M *= d

    # ---- lane-pad the vocab dimension to a multiple of 128 (lane-dense out)
    V_pad = 128 * pl.cdiv(V, 128)
    w_p = jnp.zeros((D, V_pad), jnp.float32).at[:, :V].set(w.astype(jnp.float32))
    b_p = (jnp.full((1, V_pad), PAD_BIAS, jnp.float32)
           .at[:, :V].set(b.reshape(1, V).astype(jnp.float32)))

    # ---- row tiling: capped tile, single step when the problem is tiny
    block_m = min(M, MAX_BLOCK_M)
    block_m = 8 * pl.cdiv(block_m, 8)          # sublane-align (multiple of 8)
    grid_m = pl.cdiv(M, block_m)
    M_pad = grid_m * block_m

    x2 = x.reshape(M, D).astype(jnp.float32)
    if M_pad != M:                              # tail rows: pad, never drop
        x2 = jnp.zeros((M_pad, D), jnp.float32).at[:M, :].set(x2)

    out = pl.pallas_call(
        generator_kernel,
        out_shape=jax.ShapeDtypeStruct((M_pad, V_pad), jnp.float32),
        grid=(grid_m,),
        in_specs=[pl.BlockSpec((block_m, D), lambda i: (i, 0)),
                  pl.BlockSpec((D, V_pad), lambda i: (0, 0)),   # weights resident
                  pl.BlockSpec((1, V_pad), lambda i: (0, 0))],  # bias resident
        out_specs=pl.BlockSpec((block_m, V_pad), lambda i: (i, 0)),
        compiler_params=pltpu.CompilerParams(
            # Only worth sharding across v7x's TensorCores when there is more
            # than one (large) row block; at grid=1 this is a no-op anyway.
            dimension_semantics=("parallel",) if grid_m > 1 else ("arbitrary",)),
    )(x2, w_p, b_p)

    return out[:M, :V].reshape(*lead, V)


# ----------------------------- parameters ------------------------------------
def init_params(key, d_model=D_MODEL, vocab=VOCAB):
    wk, bk = jax.random.split(key)
    # Stored transposed vs. nn.Linear ((d_model, vocab) so forward is x @ w + b).
    w = jax.random.normal(wk, (d_model, vocab), jnp.float32) / math.sqrt(d_model)
    b = jax.random.normal(bk, (vocab,), jnp.float32) * 0.02
    return w, b


# ----------------------------- main -------------------------------------------
if __name__ == "__main__":
    key = jax.random.PRNGKey(0)
    pkey, xkey = jax.random.split(key)
    w, b = init_params(pkey)
    x = jax.random.normal(xkey, (B, S, D_MODEL), jnp.float32)

    fwd = jax.jit(generator_forward)
    out = fwd(x, w, b)
    jax.block_until_ready(out)

    assert out.shape == (B, S, VOCAB)

    # reference check against plain-JAX log_softmax(linear(x))
    ref = jax.nn.log_softmax(
        x.reshape(-1, D_MODEL) @ w + b[None, :], axis=-1).reshape(B, S, VOCAB)
    assert bool(jnp.allclose(out, ref, atol=1e-3, rtol=1e-3))

    print("KERNEL_OK")
</pallas_src>

<mosaic_0001>
module attributes {stable_mosaic.version = 11 : i64} {
  func.func @generator_kernel(%arg0: i32, %arg1: memref<16x32xf32, #tpu.memory_space<vmem>>, %arg2: memref<32x128xf32, #tpu.memory_space<vmem>>, %arg3: memref<1x128xf32, #tpu.memory_space<vmem>>, %arg4: memref<16x128xf32, #tpu.memory_space<vmem>>) attributes {dimension_semantics = [#tpu.dimension_semantics<arbitrary>], iteration_bounds = array<i64: 1>, scalar_prefetch = 0 : i64, scratch_operands = 0 : i64, tpu.core_type = #tpu.core_type<tc>, window_params = [{transform_indices = @transform_0, window_bounds = array<i64: 16, 32>}, {pipeline_mode = #tpu.pipeline_mode<synchronous>, transform_indices = @transform_1, window_bounds = array<i64: 32, 128>}, {pipeline_mode = #tpu.pipeline_mode<synchronous>, transform_indices = @transform_2, window_bounds = array<i64: 1, 128>}, {transform_indices = @transform_3, window_bounds = array<i64: 16, 128>}]} {
    %c0 = arith.constant 0 : index
    %c0_0 = arith.constant 0 : index
    %0 = vector.load %arg1[%c0, %c0_0] : memref<16x32xf32, #tpu.memory_space<vmem>>, vector<16x32xf32>
    %c0_1 = arith.constant 0 : index
    %c0_2 = arith.constant 0 : index
    %1 = vector.load %arg2[%c0_1, %c0_2] : memref<32x128xf32, #tpu.memory_space<vmem>>, vector<32x128xf32>
    %cst = arith.constant dense<0.000000e+00> : vector<16x128xf32>
    %2 = tpu.matmul %0, %1, %cst {dimension_numbers = #tpu.dot_dimension_numbers<[1], [0], [0], [1], [0, 0, 1, 1], [], []>} : vector<16x32xf32>, vector<32x128xf32>, vector<16x128xf32> -> vector<16x128xf32>
    %c0_3 = arith.constant 0 : index
    %c0_4 = arith.constant 0 : index
    %3 = vector.load %arg3[%c0_3, %c0_4] : memref<1x128xf32, #tpu.memory_space<vmem>>, vector<1x128xf32>
    %4 = vector.broadcast %3 : vector<1x128xf32> to vector<16x128xf32>
    %5 = arith.addf %2, %4 : vector<16x128xf32>
    %cst_5 = arith.constant dense<0xFF800000> : vector<16xf32>
    %6 = vector.multi_reduction <maximumf>, %5, %cst_5 [1] : vector<16x128xf32> to vector<16xf32>
    %7 = vector.shape_cast %6 : vector<16xf32> to vector<16x1xf32>
    %8 = vector.broadcast %7 : vector<16x1xf32> to vector<16x128xf32>
    %9 = arith.subf %5, %8 : vector<16x128xf32>
    %10 = math.exp %9 : vector<16x128xf32>
    %cst_6 = arith.constant dense<0.000000e+00> : vector<16xf32>
    %11 = vector.multi_reduction <add>, %10, %cst_6 [1] : vector<16x128xf32> to vector<16xf32>
    %12 = vector.shape_cast %11 : vector<16xf32> to vector<16x1xf32>
    %13 = math.log %12 : vector<16x1xf32>
    %14 = vector.broadcast %13 : vector<16x1xf32> to vector<16x128xf32>
    %15 = arith.subf %9, %14 : vector<16x128xf32>
    %c0_7 = arith.constant 0 : index
    %c0_8 = arith.constant 0 : index
    %16 = vector.load %arg4[%c0_7, %c0_8] : memref<16x128xf32, #tpu.memory_space<vmem>>, vector<16x128xf32>
    tpu.vector_store %arg4[%c0_7, %c0_8], %15 {strides = array<i32>} : memref<16x128xf32, #tpu.memory_space<vmem>>, vector<16x128xf32>,
    return
  }
  func.func @transform_0(%arg0: i32) -> (i32, i32) {
    %c0_i32 = arith.constant 0 : i32
    %c0_i32_0 = arith.constant 0 : i32
    return %arg0, %c0_i32 : i32, i32
  }
  func.func @transform_1(%arg0: i32) -> (i32, i32) {
    %c0_i32 = arith.constant 0 : i32
    %c0_i32_0 = arith.constant 0 : i32
    %c0_i32_1 = arith.constant 0 : i32
    return %c0_i32, %c0_i32_0 : i32, i32
  }
  func.func @transform_2(%arg0: i32) -> (i32, i32) {
    %c0_i32 = arith.constant 0 : i32
    %c0_i32_0 = arith.constant 0 : i32
    %c0_i32_1 = arith.constant 0 : i32
    return %c0_i32, %c0_i32_0 : i32, i32
  }
  func.func @transform_3(%arg0: i32) -> (i32, i32) {
    %c0_i32 = arith.constant 0 : i32
    %c0_i32_0 = arith.constant 0 : i32
    return %arg0, %c0_i32 : i32, i32
  }
}

</mosaic_0001>

<llo_original>
// kernel: generator_forward.1
$region0: #{generator_forward.1}
  #allocation0 [shape = 'u32[]', space=smem, size = 0x4, offset = 0x4, fixed_abs, tag = 'smem constant byte address 0x4 - core index']
  #allocation1 [shape = 'u32[144,128]{1,0:T(1,128)}', space=vmem, size = 0x12000, scoped, tag = 'internal scratch']
  %s0 = inlined_call_operand.vmem [shape: f32[16,32], index: 0, kind: input, shape index: {}]
  %s1 = inlined_call_operand.vmem [shape: f32[32,128], index: 1, kind: input, shape index: {}]
  %s2 = inlined_call_operand.vmem [shape: f32[1,128], index: 2, kind: input, shape index: {}]
  %s3 = inlined_call_operand.vmem [shape: f32[16,128], index: 3, kind: output, shape index: {}]
  %s4 = sld [smem:[#allocation0]]
  $region22: #{generator_forward.1} parent=0
    _
  %s6 = ssub.s32 1, %s4
  %s7 = scalar_select 0, %s6, %s4
  // Predicated region
  $region2: #{generator_forward.1} parent=0 // pred_check
    _
  $region3: #{generator_forward.1} parent=0 // pred_check_branch
    %9 = sbr.rel (0) target = $region5
  $region4: #{generator_forward.1} parent=0 // pred_region
    _
  $region5: #{generator_forward.1} parent=0 // pred_fallthru
    _
  // Predicated region
  $region6: #{generator_forward.1} parent=0 // pred_check
    _
  $region7: #{generator_forward.1} parent=0 // pred_check_branch
    %11 = sbr.rel (0) target = $region9
  $region8: #{generator_forward.1} parent=0 // pred_region
    _
  $region9: #{generator_forward.1} parent=0 // pred_fallthru
    _
  // Predicated region
  $region10: #{generator_forward.1} parent=0 // pred_check
    _
  $region11: #{generator_forward.1} parent=0 // pred_check_branch
    %13 = sbr.rel (0) target = $region13
  $region12: #{generator_forward.1} parent=0 // pred_region
    _
  $region13: #{generator_forward.1} parent=0 // pred_fallthru
    _
  %v14 = vld [vmem:[%s0] sm:$0xff]
  %v15 = vld [vmem:[%s0 + $0x8] sm:$0xff]
  %v16 = vld [vmem:[%s1] sm:$0xff]
  %v17 = vld [vmem:[%s1 + $0x8] sm:$0xff]
  %v18 = vld [vmem:[%s1 + $0x10] sm:$0xff]
  %v19 = vld [vmem:[%s1 + $0x18] sm:$0xff]
  %v20 = vld [vmem:[%s2] sm:$0x1]
  %v22 = vlaneseq
  %v23 = vshrl.u32 %v22, 7
  %v24 = vsub.s32 0, %v23
  %v25 = vrot.slane %v20, %v24
  %vm27 = vcmask 261120
  %v29 = vsel %vm27, %v14, 0
  %v32 = vsel %vm27, %v15, 0
  %34 = vmatprep.subr.mxu0 0.0
  %35 = vmatpush1.msra.mxu0 0.0
  %36 = vmatprep.subr.mxu0 0.0
  %37 = vmatpush1.msra.mxu0 0.0
  %38 = vmatprep.subr.mxu0 0.0
  %39 = vmatpush1.msra.mxu0 0.0
  %40 = vmatprep.subr.mxu0 0.0
  %41 = vmatpush1.msra.mxu0 0.0
  %42 = vmatprep.subr.mxu0 0.0
  %43 = vmatpush1.msra.mxu0 0.0
  %44 = vmatprep.subr.mxu0 0.0
  %45 = vmatpush1.msra.mxu0 0.0
  %46 = vmatprep.subr.mxu0 0.0
  %47 = vmatpush1.msra.mxu0 0.0
  %48 = vmatprep.subr.mxu0 0.0
  %49 = vmatpush1.msra.mxu0 0.0
  %50 = vmatprep.subr.mxu0 0.0
  %51 = vmatpush1.msra.mxu0 0.0
  %52 = vmatprep.subr.mxu0 0.0
  %53 = vmatpush1.msra.mxu0 0.0
  %54 = vmatprep.subr.mxu0 0.0
  %55 = vmatpush1.msra.mxu0 0.0
  %56 = vmatprep.subr.mxu0 0.0
  %57 = vmatpush1.msra.mxu0 0.0
  %58 = vmatprep.subr.mxu0 0.0
  %59 = vmatpush1.msra.mxu0 %v19
  %60 = vmatprep.subr.mxu0 0.0
  %61 = vmatpush1.msra.mxu0 %v18
  %62 = vmatprep.subr.mxu0 0.0
  %63 = vmatpush1.msra.mxu0 %v17
  %64 = vmatprep.subr.mxu0 0.0
  %65 = vmatpush1.msra.mxu0 %v16
  %66 = vmatprep.subr.mxu0 0.0
  %67 = vmatpush2.msra.mxu0 0.0
  %68 = vmatprep.subr.mxu0 0.0
  %69 = vmatpush2.msra.mxu0 0.0
  %70 = vmatprep.subr.mxu0 0.0
  %71 = vmatpush2.msra.mxu0 0.0
  %72 = vmatprep.subr.mxu0 0.0
  %73 = vmatpush2.msra.mxu0 0.0
  %74 = vmatprep.subr.mxu0 0.0
  %75 = vmatpush2.msra.mxu0 0.0
  %76 = vmatprep.subr.mxu0 0.0
  %77 = vmatpush2.msra.mxu0 0.0
  %78 = vmatprep.subr.mxu0 0.0
  %79 = vmatpush2.msra.mxu0 0.0
  %80 = vmatprep.subr.mxu0 0.0
  %81 = vmatpush2.msra.mxu0 0.0
  %82 = vmatprep.subr.mxu0 0.0
  %83 = vmatpush2.msra.mxu0 0.0
  %84 = vmatprep.subr.mxu0 0.0
  %85 = vmatpush2.msra.mxu0 0.0
  %86 = vmatprep.subr.mxu0 0.0
  %87 = vmatpush2.msra.mxu0 0.0
  %88 = vmatprep.subr.mxu0 0.0
  %89 = vmatpush2.msra.mxu0 0.0
  %90 = vmatprep.subr.mxu0 0.0
  %91 = vmatpush2.msra.mxu0 0.0
  %92 = vmatprep.subr.mxu0 0.0
  %93 = vmatpush2.msra.mxu0 0.0
  %94 = vmatprep.subr.mxu0 0.0
  %95 = vmatpush2.msra.mxu0 0.0
  %96 = vmatprep.subr.mxu0 0.0
  %97 = vmatpush2.msra.mxu0 0.0
  %98 = vmatprep.mubr.f32.mxu0 0.0
  %99 = vmatmul.mubr.f32.gmra.mxu0 %v29
  %v100 = vpop.f32.mrf.mxu0
  %v101 = vadd.f32 %v25, %v100
  %v102 = vpop.f32.mrf.mxu0
  %103 = vmatprep.mubr.f32.mxu0 0.0
  %104 = vmatmul.mubr.f32.gmra.mxu0 %v32
  %v105 = vpop.f32.mrf.mxu0
  %v106 = vadd.f32 %v25, %v105
  %v107 = vpop.f32.mrf.mxu0
  %108 = vdwg.mxu0
  %109 = vmax.xlane.f32.xlu0 %v101
  %v110 = vpop.xlane.xlu0 %109
  %111 = vmax.xlane.f32.xlu0 %v106
  %v112 = vpop.xlane.xlu0 %111
  %v113 = vsub.f32 %v101, %v110
  %v114 = vsub.f32 %v106, %v112
  %v115 = vmul.f32 %v113, 1.442695
  %v116 = vpow.pop %v115
  %v117 = vmul.f32 %v114, 1.442695
  %v118 = vpow.pop %v117
  %119 = vadd.xlane.f32.xlu0 %v116
  %v120 = vpop.xlane.xlu0 %119
  %121 = vadd.xlane.f32.xlu0 %v118
  %v122 = vpop.xlane.xlu0 %121
  %v123 = vlog2.pop %v120
  %v124 = vmul.f32 %v123, 0.6931472
  %v125 = vlog2.pop %v122
  %v126 = vmul.f32 %v125, 0.6931472
  %v127 = vsub.f32 %v113, %v124
  %v128 = vsub.f32 %v114, %v126
  %129 = vst [vmem:[%s3] sm:$0xff] %v127
  %130 = vst [vmem:[%s3 + $0x8] sm:$0xff] %v128
  // Predicated region
  $region14: #{generator_forward.1} parent=0 // pred_check
    _
  $region15: #{generator_forward.1} parent=0 // pred_check_branch
    %132 = sbr.rel (0) target = $region17
  $region16: #{generator_forward.1} parent=0 // pred_region
    _
  $region17: #{generator_forward.1} parent=0 // pred_fallthru
    _
  // Predicated region
  $region18: #{generator_forward.1} parent=0 // pred_check
    _
  $region19: #{generator_forward.1} parent=0 // pred_check_branch
    %134 = sbr.rel (0) target = $region21
  $region20: #{generator_forward.1} parent=0 // pred_region
    _
  $region21: #{generator_forward.1} parent=0 // pred_fallthru
    _

</llo_original>
